<compile_context>
chip_gen: v6e
topology: v6e:2x2x1
jax: 0.10.0
libtpu: 0.0.40
codegen_flags: <defaults>
</compile_context>

<pallas_src>
import functools

import jax
import jax.numpy as jnp
from jax import lax
from jax.experimental import pallas as pl
from jax.experimental.pallas import tpu as pltpu


def _round_up(x, m):
    return ((x + m - 1) // m) * m


def _encoder_gru_kernel(x_ref,      # (Tp, Kp)   embedded tokens, param dtype
                        wih_ref,    # (Kp, 3Hg)  W_ih^T (gate cols r|z|n), param dtype
                        whh_ref,    # (Kp, 3Hg)  W_hh^T,                   param dtype
                        bih_ref,    # (1, 3Hg)   f32
                        bhh_ref,    # (1, 3Hg)   f32
                        h0_ref,     # (1, Hg)    f32 initial hidden
                        out_ref,    # (Tp, Hg)   f32 hidden state after each step
                        gi_ref,     # VMEM scratch (Tp, 3Hg) f32
                        *, seq_len, hidden_pad, k_pad, unroll):
    Hg = hidden_pad

    # ---- Phase 1: batched input projection for every time step (one MXU op).
    gi_ref[...] = (
        jnp.dot(x_ref[...], wih_ref[...], preferred_element_type=jnp.float32)
        + bih_ref[...])

    # Hoist loop-invariant VMEM loads out of the recurrence.
    whh = whh_ref[...]
    bhh = bhh_ref[...]

    # ---- Phase 2: sequential GRU recurrence; h carried in vregs.
    def step(t, h):
        gi = gi_ref[pl.ds(t, 1), :]                       # (1, 3Hg) f32
        h_k = h[:, :k_pad].astype(whh.dtype)              # slice to contraction width
        gh = jnp.dot(h_k, whh, preferred_element_type=jnp.float32) + bhh
        # PyTorch nn.GRU gate order: r, z, n.  All element-wise math in f32.
        r = jax.nn.sigmoid(gi[:, 0:Hg] + gh[:, 0:Hg])
        z = jax.nn.sigmoid(gi[:, Hg:2 * Hg] + gh[:, Hg:2 * Hg])
        n = jnp.tanh(gi[:, 2 * Hg:3 * Hg] + r * gh[:, 2 * Hg:3 * Hg])
        h_new = (1.0 - z) * n + z * h                     # (1, Hg) f32
        out_ref[pl.ds(t, 1), :] = h_new                   # staged in the VMEM out block
        return h_new

    lax.fori_loop(0, seq_len, step, h0_ref[...], unroll=unroll)


def prepare_params(params, param_dtype=jnp.float32):
    """One-time prep: transpose, gate-wise pad H->Hg (lane, 128) and the
    contraction dim H->Kp (sublane, 16), optionally cast weights/embedding to
    bf16 (biases stay f32)."""
    emb = jnp.asarray(params["embedding"], jnp.float32)
    V, H = emb.shape
    Hg = _round_up(H, 128)      # per-gate lane width (padded)
    Kp = _round_up(H, 16)       # contraction width (sublane-aligned only)

    emb_p = jnp.zeros((V, Kp), jnp.float32).at[:, :H].set(emb)

    def pad_w(w):               # torch (3H, H) -> (Kp, 3Hg), gate columns [r|z|n]
        wt = jnp.asarray(w, jnp.float32).T                # (H, 3H)
        out = jnp.zeros((Kp, 3 * Hg), jnp.float32)
        for g in range(3):
            out = out.at[:H, g * Hg:g * Hg + H].set(wt[:, g * H:(g + 1) * H])
        return out

    def pad_b(b):               # (3H,) -> (1, 3Hg)
        bf = jnp.asarray(b, jnp.float32)
        out = jnp.zeros((1, 3 * Hg), jnp.float32)
        for g in range(3):
            out = out.at[0, g * Hg:g * Hg + H].set(bf[g * H:(g + 1) * H])
        return out

    return {
        "H": H, "Hg": Hg, "Kp": Kp,
        "emb": emb_p.astype(param_dtype),
        "wih_t": pad_w(params["w_ih"]).astype(param_dtype),
        "whh_t": pad_w(params["w_hh"]).astype(param_dtype),
        "bih": pad_b(params["b_ih"]),
        "bhh": pad_b(params["b_hh"]),
    }


def encoder_rnn_sequence(prepped, token_ids, hidden):
    """Run the EncoderRNN over a whole token sequence in ONE pallas_call.

    token_ids : int32 (T,)
    hidden    : (1, 1, H) f32 initial hidden state
    Returns (outputs, hidden): (T, 1, H) and (1, 1, H), matching torch.nn.GRU
    applied step by step with seq_len = batch = 1.
    """
    H, Hg, Kp = prepped["H"], prepped["Hg"], prepped["Kp"]
    T = int(token_ids.shape[0])
    Tp = _round_up(T, 8)

    ids = jnp.asarray(token_ids, jnp.int32)
    # Batched embedding gather (tiny XLA gather) — per-step gather DMAs are gone.
    x_seq = jnp.take(prepped["emb"], ids, axis=0)                 # (T, Kp)
    if Tp != T:
        x_seq = jnp.zeros((Tp, Kp), x_seq.dtype).at[:T, :].set(x_seq)

    h0 = jnp.zeros((1, Hg), jnp.float32).at[:, :H].set(
        jnp.asarray(hidden, jnp.float32).reshape(1, H))

    kernel = functools.partial(
        _encoder_gru_kernel, seq_len=T, hidden_pad=Hg, k_pad=Kp,
        unroll=True if T <= 16 else 8)

    w_itemsize = prepped["wih_t"].dtype.itemsize
    resident = (Tp * Kp * w_itemsize                       # embedded inputs
                + 2 * Kp * 3 * Hg * w_itemsize             # W_ih^T, W_hh^T
                + 2 * 3 * Hg * 4 + Hg * 4                  # biases + h0
                + Tp * Hg * 4)                             # output block
    scratch = Tp * 3 * Hg * 4                              # gi staging
    vmem_limit = int(min(max(2 * resident + scratch + (2 << 20), 32 << 20),
                         64 << 20))

    cost = pl.CostEstimate(
        flops=int(2 * (Tp + T) * Kp * 3 * Hg),             # batched gi + T recurrent matmuls
        transcendentals=int(T * 3 * Hg),                   # 2 sigmoid + 1 tanh per lane/step
        bytes_accessed=int(resident),
    )

    out = pl.pallas_call(
        kernel,
        out_shape=jax.ShapeDtypeStruct((Tp, Hg), jnp.float32),
        grid_spec=pltpu.PrefetchScalarGridSpec(
            num_scalar_prefetch=0,
            grid=(1,),                                     # whole sequence in one step
            in_specs=[
                pl.BlockSpec((Tp, Kp), lambda i: (0, 0)),
                pl.BlockSpec((Kp, 3 * Hg), lambda i: (0, 0)),
                pl.BlockSpec((Kp, 3 * Hg), lambda i: (0, 0)),
                pl.BlockSpec((1, 3 * Hg), lambda i: (0, 0)),
                pl.BlockSpec((1, 3 * Hg), lambda i: (0, 0)),
                pl.BlockSpec((1, Hg), lambda i: (0, 0)),
            ],
            out_specs=pl.BlockSpec((Tp, Hg), lambda i: (0, 0)),
            scratch_shapes=[pltpu.VMEM((Tp, 3 * Hg), jnp.float32)],
        ),
        compiler_params=pltpu.CompilerParams(
            dimension_semantics=("arbitrary",),            # recurrence is sequential
            vmem_limit_bytes=vmem_limit),
        cost_estimate=cost,
    )(x_seq, prepped["wih_t"], prepped["whh_t"],
      prepped["bih"], prepped["bhh"], h0)

    outputs = out[:T, :H].reshape(T, 1, H)                 # strip T / lane padding
    final_hidden = outputs[-1].reshape(1, 1, H)            # hidden == last output
    return outputs, final_hidden


def encoder_rnn_forward(prepped, data_in, hidden):
    """Single-word step, matching EncoderRNN.forward(data_in, hidden)."""
    ids = jnp.asarray(data_in, jnp.int32).reshape((1,))
    outputs, new_hidden = encoder_rnn_sequence(prepped, ids, hidden)
    return outputs.reshape(1, 1, prepped["H"]), new_hidden


def _reference_sequence(params, token_ids, hidden):
    """Pure-JAX f32 reference of the torch module applied token by token."""
    H = hidden.shape[-1]
    h = hidden.reshape(1, H)
    outs = []
    for tok in token_ids:
        x = params["embedding"][tok].reshape(1, H)
        gi = x @ params["w_ih"].T + params["b_ih"]
        gh = h @ params["w_hh"].T + params["b_hh"]
        r = jax.nn.sigmoid(gi[:, :H] + gh[:, :H])
        z = jax.nn.sigmoid(gi[:, H:2 * H] + gh[:, H:2 * H])
        n = jnp.tanh(gi[:, 2 * H:] + r * gh[:, 2 * H:])
        h = (1.0 - z) * n + z * h
        outs.append(h)
    return jnp.stack(outs).reshape(-1, 1, H), h.reshape(1, 1, H)


def init_params(key, input_size, hidden_size):
    """Deterministic synthetic params; shapes match nn.Embedding + nn.GRU."""
    k_emb, k_wih, k_whh, k_bih, k_bhh = jax.random.split(key, 5)
    bound = 1.0 / jnp.sqrt(hidden_size)
    return {
        "embedding": jax.random.normal(k_emb, (input_size, hidden_size),
                                       jnp.float32),
        "w_ih": jax.random.uniform(k_wih, (3 * hidden_size, hidden_size),
                                   jnp.float32, -bound, bound),
        "w_hh": jax.random.uniform(k_whh, (3 * hidden_size, hidden_size),
                                   jnp.float32, -bound, bound),
        "b_ih": jax.random.uniform(k_bih, (3 * hidden_size,),
                                   jnp.float32, -bound, bound),
        "b_hh": jax.random.uniform(k_bhh, (3 * hidden_size,),
                                   jnp.float32, -bound, bound),
    }


if __name__ == "__main__":
    INPUT_SIZE = 10      # vocabulary size
    HIDDEN_SIZE = 32
    SEQ_LEN = 8

    key = jax.random.PRNGKey(0)
    params = init_params(key, INPUT_SIZE, HIDDEN_SIZE)
    hidden0 = jnp.zeros((1, 1, HIDDEN_SIZE), jnp.float32)   # init_hidden()

    # One-time param prep (transpose / pad / cast) — hoisted off the step path.
    prepped_f32 = prepare_params(params, param_dtype=jnp.float32)

    # --- 1) Single-word forward, exactly the module's contract -------------
    data_in = jnp.asarray(3, jnp.int32)
    out1, hid1 = encoder_rnn_forward(prepped_f32, data_in, hidden0)
    jax.block_until_ready(out1)
    ref_out1, ref_hid1 = _reference_sequence(params, data_in.reshape(1), hidden0)
    assert out1.shape == (1, 1, HIDDEN_SIZE)
    assert hid1.shape == (1, 1, HIDDEN_SIZE)
    assert jnp.allclose(out1, ref_out1.reshape(1, 1, HIDDEN_SIZE),
                        atol=1e-5, rtol=1e-5)
    assert jnp.allclose(hid1, ref_hid1, atol=1e-5, rtol=1e-5)

    # --- 2) Whole sequence in one pallas_call (f32 weights) ----------------
    token_ids = jax.random.randint(jax.random.PRNGKey(1), (SEQ_LEN,),
                                   0, INPUT_SIZE, jnp.int32)
    seq_out, seq_hid = encoder_rnn_sequence(prepped_f32, token_ids, hidden0)
    jax.block_until_ready(seq_out)
    ref_seq_out, ref_seq_hid = _reference_sequence(params, token_ids, hidden0)
    assert seq_out.shape == (SEQ_LEN, 1, HIDDEN_SIZE)
    assert jnp.allclose(seq_out, ref_seq_out, atol=1e-5, rtol=1e-5)
    assert jnp.allclose(seq_hid, ref_seq_hid, atol=1e-5, rtol=1e-5)

    # --- 3) Sequence length not a multiple of 8 (exercises T padding) ------
    token_ids5 = jax.random.randint(jax.random.PRNGKey(2), (5,),
                                    0, INPUT_SIZE, jnp.int32)
    out5, hid5 = encoder_rnn_sequence(prepped_f32, token_ids5, hidden0)
    jax.block_until_ready(out5)
    ref_out5, ref_hid5 = _reference_sequence(params, token_ids5, hidden0)
    assert jnp.allclose(out5, ref_out5, atol=1e-5, rtol=1e-5)
    assert jnp.allclose(hid5, ref_hid5, atol=1e-5, rtol=1e-5)

    # --- 4) bf16 weights (MXU inputs only; f32 accumulate + gate math) -----
    # Note: h is re-cast to bf16 before the W_hh matmul each step; fine at
    # this T/tolerance — keep W_hh in f32 for very long sequences.
    prepped_bf16 = prepare_params(params, param_dtype=jnp.bfloat16)
    seq_out_bf, seq_hid_bf = encoder_rnn_sequence(prepped_bf16, token_ids, hidden0)
    jax.block_until_ready(seq_out_bf)
    assert jnp.allclose(seq_out_bf, ref_seq_out, atol=3e-2, rtol=3e-2)
    assert jnp.allclose(seq_hid_bf, ref_seq_hid, atol=3e-2, rtol=3e-2)

    print("KERNEL_OK")
</pallas_src>

<mosaic_0001>
module attributes {stable_mosaic.version = 11 : i64} {
  func.func @_encoder_gru_kernel(%arg0: i32, %arg1: memref<8x32xf32, #tpu.memory_space<vmem>>, %arg2: memref<32x384xf32, #tpu.memory_space<vmem>>, %arg3: memref<32x384xf32, #tpu.memory_space<vmem>>, %arg4: memref<1x384xf32, #tpu.memory_space<vmem>>, %arg5: memref<1x384xf32, #tpu.memory_space<vmem>>, %arg6: memref<1x128xf32, #tpu.memory_space<vmem>>, %arg7: memref<8x128xf32, #tpu.memory_space<vmem>>, %arg8: memref<8x384xf32, #tpu.memory_space<vmem>>) attributes {dimension_semantics = [#tpu.dimension_semantics<arbitrary>], iteration_bounds = array<i64: 1>, scalar_prefetch = 0 : i64, scratch_operands = 1 : i64, tpu.core_type = #tpu.core_type<tc>, window_params = [{pipeline_mode = #tpu.pipeline_mode<synchronous>, transform_indices = @transform_0, window_bounds = array<i64: 8, 32>}, {pipeline_mode = #tpu.pipeline_mode<synchronous>, transform_indices = @transform_1, window_bounds = array<i64: 32, 384>}, {pipeline_mode = #tpu.pipeline_mode<synchronous>, transform_indices = @transform_2, window_bounds = array<i64: 32, 384>}, {pipeline_mode = #tpu.pipeline_mode<synchronous>, transform_indices = @transform_3, window_bounds = array<i64: 1, 384>}, {pipeline_mode = #tpu.pipeline_mode<synchronous>, transform_indices = @transform_4, window_bounds = array<i64: 1, 384>}, {pipeline_mode = #tpu.pipeline_mode<synchronous>, transform_indices = @transform_5, window_bounds = array<i64: 1, 128>}, {pipeline_mode = #tpu.pipeline_mode<synchronous>, transform_indices = @transform_6, window_bounds = array<i64: 8, 128>}]} {
    %c0 = arith.constant 0 : index
    %c0_0 = arith.constant 0 : index
    %0 = vector.load %arg1[%c0, %c0_0] : memref<8x32xf32, #tpu.memory_space<vmem>>, vector<8x32xf32>
    %c0_1 = arith.constant 0 : index
    %c0_2 = arith.constant 0 : index
    %1 = vector.load %arg2[%c0_1, %c0_2] : memref<32x384xf32, #tpu.memory_space<vmem>>, vector<32x384xf32>
    %cst = arith.constant dense<0.000000e+00> : vector<8x384xf32>
    %2 = tpu.matmul %0, %1, %cst {dimension_numbers = #tpu.dot_dimension_numbers<[1], [0], [0], [1], [0, 0, 1, 1], [], []>} : vector<8x32xf32>, vector<32x384xf32>, vector<8x384xf32> -> vector<8x384xf32>
    %c0_3 = arith.constant 0 : index
    %c0_4 = arith.constant 0 : index
    %3 = vector.load %arg4[%c0_3, %c0_4] : memref<1x384xf32, #tpu.memory_space<vmem>>, vector<1x384xf32>
    %4 = vector.broadcast %3 : vector<1x384xf32> to vector<8x384xf32>
    %5 = arith.addf %2, %4 : vector<8x384xf32>
    %c0_5 = arith.constant 0 : index
    %c0_6 = arith.constant 0 : index
    %6 = vector.load %arg8[%c0_5, %c0_6] : memref<8x384xf32, #tpu.memory_space<vmem>>, vector<8x384xf32>
    tpu.vector_store %arg8[%c0_5, %c0_6], %5 {strides = array<i32>} : memref<8x384xf32, #tpu.memory_space<vmem>>, vector<8x384xf32>,
    %c0_7 = arith.constant 0 : index
    %c0_8 = arith.constant 0 : index
    %7 = vector.load %arg3[%c0_7, %c0_8] : memref<32x384xf32, #tpu.memory_space<vmem>>, vector<32x384xf32>
    %c0_9 = arith.constant 0 : index
    %c0_10 = arith.constant 0 : index
    %8 = vector.load %arg5[%c0_9, %c0_10] : memref<1x384xf32, #tpu.memory_space<vmem>>, vector<1x384xf32>
    %c0_11 = arith.constant 0 : index
    %c0_12 = arith.constant 0 : index
    %9 = vector.load %arg6[%c0_11, %c0_12] : memref<1x128xf32, #tpu.memory_space<vmem>>, vector<1x128xf32>
    %c0_i32 = arith.constant 0 : i32
    %10 = arith.index_cast %c0_i32 : i32 to index
    %c0_13 = arith.constant 0 : index
    %11 = vector.load %arg8[%10, %c0_13] : memref<8x384xf32, #tpu.memory_space<vmem>>, vector<1x384xf32>
    %12 = vector.extract_strided_slice %9 {offsets = [0, 0], sizes = [1, 32], strides = [1, 1]} : vector<1x128xf32> to vector<1x32xf32>
    %cst_14 = arith.constant dense<0.000000e+00> : vector<1x384xf32>
    %13 = tpu.matmul %12, %7, %cst_14 {dimension_numbers = #tpu.dot_dimension_numbers<[1], [0], [0], [1], [0, 0, 1, 1], [], []>} : vector<1x32xf32>, vector<32x384xf32>, vector<1x384xf32> -> vector<1x384xf32>
    %14 = arith.addf %13, %8 : vector<1x384xf32>
    %15 = vector.extract_strided_slice %11 {offsets = [0, 0], sizes = [1, 128], strides = [1, 1]} : vector<1x384xf32> to vector<1x128xf32>
    %16 = vector.extract_strided_slice %14 {offsets = [0, 0], sizes = [1, 128], strides = [1, 1]} : vector<1x384xf32> to vector<1x128xf32>
    %17 = arith.addf %15, %16 : vector<1x128xf32>
    %18 = arith.negf %17 : vector<1x128xf32>
    %19 = math.exp %18 : vector<1x128xf32>
    %cst_15 = arith.constant 1.000000e+00 : f32
    %20 = vector.broadcast %cst_15 : f32 to vector<1x128xf32>
    %21 = arith.addf %20, %19 : vector<1x128xf32>
    %22 = arith.divf %20, %21 : vector<1x128xf32>
    %23 = vector.extract_strided_slice %11 {offsets = [0, 128], sizes = [1, 128], strides = [1, 1]} : vector<1x384xf32> to vector<1x128xf32>
    %24 = vector.extract_strided_slice %14 {offsets = [0, 128], sizes = [1, 128], strides = [1, 1]} : vector<1x384xf32> to vector<1x128xf32>
    %25 = arith.addf %23, %24 : vector<1x128xf32>
    %26 = arith.negf %25 : vector<1x128xf32>
    %27 = math.exp %26 : vector<1x128xf32>
    %cst_16 = arith.constant 1.000000e+00 : f32
    %28 = vector.broadcast %cst_16 : f32 to vector<1x128xf32>
    %29 = arith.addf %28, %27 : vector<1x128xf32>
    %30 = arith.divf %28, %29 : vector<1x128xf32>
    %31 = vector.extract_strided_slice %11 {offsets = [0, 256], sizes = [1, 128], strides = [1, 1]} : vector<1x384xf32> to vector<1x128xf32>
    %32 = vector.extract_strided_slice %14 {offsets = [0, 256], sizes = [1, 128], strides = [1, 1]} : vector<1x384xf32> to vector<1x128xf32>
    %33 = arith.mulf %22, %32 : vector<1x128xf32>
    %34 = arith.addf %31, %33 : vector<1x128xf32>
    %35 = math.tanh %34 : vector<1x128xf32>
    %cst_17 = arith.constant 1.000000e+00 : f32
    %36 = vector.broadcast %cst_17 : f32 to vector<1x128xf32>
    %37 = arith.subf %36, %30 : vector<1x128xf32>
    %38 = arith.mulf %37, %35 : vector<1x128xf32>
    %39 = arith.mulf %30, %9 : vector<1x128xf32>
    %40 = arith.addf %38, %39 : vector<1x128xf32>
    %41 = arith.index_cast %c0_i32 : i32 to index
    %c0_18 = arith.constant 0 : index
    %42 = vector.load %arg7[%41, %c0_18] : memref<8x128xf32, #tpu.memory_space<vmem>>, vector<1x128xf32>
    tpu.vector_store %arg7[%41, %c0_18], %40 {strides = array<i32>} : memref<8x128xf32, #tpu.memory_space<vmem>>, vector<1x128xf32>,
    %c1_i32 = arith.constant 1 : i32
    return
  }
  func.func @transform_0(%arg0: i32) -> (i32, i32) {
    %c0_i32 = arith.constant 0 : i32
    %c0_i32_0 = arith.constant 0 : i32
    %c0_i32_1 = arith.constant 0 : i32
    return %c0_i32, %c0_i32_0 : i32, i32
  }
  func.func @transform_1(%arg0: i32) -> (i32, i32) {
    %c0_i32 = arith.constant 0 : i32
    %c0_i32_0 = arith.constant 0 : i32
    %c0_i32_1 = arith.constant 0 : i32
    return %c0_i32, %c0_i32_0 : i32, i32
  }
  func.func @transform_2(%arg0: i32) -> (i32, i32) {
    %c0_i32 = arith.constant 0 : i32
    %c0_i32_0 = arith.constant 0 : i32
    %c0_i32_1 = arith.constant 0 : i32
    return %c0_i32, %c0_i32_0 : i32, i32
  }
  func.func @transform_3(%arg0: i32) -> (i32, i32) {
    %c0_i32 = arith.constant 0 : i32
    %c0_i32_0 = arith.constant 0 : i32
    %c0_i32_1 = arith.constant 0 : i32
    return %c0_i32, %c0_i32_0 : i32, i32
  }
  func.func @transform_4(%arg0: i32) -> (i32, i32) {
    %c0_i32 = arith.constant 0 : i32
    %c0_i32_0 = arith.constant 0 : i32
    %c0_i32_1 = arith.constant 0 : i32
    return %c0_i32, %c0_i32_0 : i32, i32
  }
  func.func @transform_5(%arg0: i32) -> (i32, i32) {
    %c0_i32 = arith.constant 0 : i32
    %c0_i32_0 = arith.constant 0 : i32
    %c0_i32_1 = arith.constant 0 : i32
    return %c0_i32, %c0_i32_0 : i32, i32
  }
  func.func @transform_6(%arg0: i32) -> (i32, i32) {
    %c0_i32 = arith.constant 0 : i32
    %c0_i32_0 = arith.constant 0 : i32
    %c0_i32_1 = arith.constant 0 : i32
    return %c0_i32, %c0_i32_0 : i32, i32
  }
}

</mosaic_0001>

<llo_original>
// kernel: tpu_custom_call.1
$region0: #{tpu_custom_call.1}
  #allocation0 [shape = 'u32[]', space=smem, size = 0x4, offset = 0x4, fixed_abs, tag = 'smem constant byte address 0x4 - core index']
  #allocation1 [shape = 'u32[144,128]{1,0:T(1,128)}', space=vmem, size = 0x12000, scoped, tag = 'internal scratch']
  #allocation2 [shape = 'f32[8,384]{1,0:T(8,128)}', space=vmem, size = 0x3000, scoped, tag = 'scratch operand']
  %s0 = inlined_call_operand.hbm [shape: f32[8,32], index: 0, kind: input, shape index: {}]
  %s1 = inlined_call_operand.hbm [shape: f32[32,384], index: 1, kind: input, shape index: {}]
  %s2 = inlined_call_operand.hbm [shape: f32[32,384], index: 2, kind: input, shape index: {}]
  %s3 = inlined_call_operand.vmem [shape: f32[1,384], index: 3, kind: input, shape index: {}]
  %s4 = inlined_call_operand.vmem [shape: f32[1,384], index: 4, kind: input, shape index: {}]
  %s5 = inlined_call_operand.vmem [shape: f32[1,128], index: 5, kind: input, shape index: {}]
  %s6 = inlined_call_operand.hbm [shape: f32[8,128], index: 6, kind: output, shape index: {}]
  %s7 = sld [smem:[#allocation0]]
  $region46: #{tpu_custom_call.1} parent=0
    _
  %s9 = ssub.s32 1, %s7
  %s10 = scalar_select 0, %s9, %s7
  $region1: #{tpu_custom_call.1} parent=0
    #allocation3 [shape = 'u8[4096]{0}', space=vmem, size = 0x1000, scoped, tag = 'input window, operand 0, single buffered']
    #allocation4 [shape = 's32[1]{0}', space=sflag, size = 0x4, scoped, tag = 'scoped memory for tpu_custom_call.1']
    #allocation5 [shape = 's32[1]{0}', space=sflag, size = 0x4, scoped, tag = 'scoped memory for tpu_custom_call.1']
    #allocation6 [shape = 'u8[49152]{0}', space=vmem, size = 0xc000, scoped, tag = 'input window, operand 1, single buffered']
    #allocation7 [shape = 's32[1]{0}', space=sflag, size = 0x4, scoped, tag = 'scoped memory for tpu_custom_call.1']
    #allocation8 [shape = 'u8[49152]{0}', space=vmem, size = 0xc000, scoped, tag = 'input window, operand 2, single buffered']
    #allocation9 [shape = 'u8[4096]{0}', space=vmem, size = 0x1000, scoped, tag = 'output window, operand 0, single buffered']
    %11 = vsyncpa [#allocation4], 0
    %12 = vsyncpa [#allocation7], 0
    %13 = vsyncpa [#allocation5], 0
    // Predicated region
    $region2: #{tpu_custom_call.1} parent=1 // pred_check
      _
    $region3: #{tpu_custom_call.1} parent=1 // pred_check_branch
      %15 = sbr.rel (0) target = $region5
    $region4: #{tpu_custom_call.1} parent=1 // pred_region
      %s17 = ssub.s32 128, 128
      %18 = vsyncadd [#allocation4], %s17
      %s20 = sshll.u32 [#allocation3], 4
      %s21 = int_to_ptr.vmem [resolvable:$true] %s20
      %23 = dma.hbm_to_vmem [thread:$0]  %s0, 128, %s21, [#allocation4]
    $region5: #{tpu_custom_call.1} parent=1 // pred_fallthru
      _
    // Predicated region
    $region6: #{tpu_custom_call.1} parent=1 // pred_check
      _
    $region7: #{tpu_custom_call.1} parent=1 // pred_check_branch
      %25 = sbr.rel (0) target = $region9
    $region8: #{tpu_custom_call.1} parent=1 // pred_region
      %s27 = ssub.s32 1536, 1536
      %28 = vsyncadd [#allocation7], %s27
      %s29 = sshll.u32 [#allocation6], 4
      %s30 = int_to_ptr.vmem [resolvable:$true] %s29
      %35 = dma.hbm_to_vmem [thread:$0]  %s1, 1536, %s30, [#allocation7], 384, 384, 24
    $region9: #{tpu_custom_call.1} parent=1 // pred_fallthru
      _
    // Predicated region
    $region10: #{tpu_custom_call.1} parent=1 // pred_check
      _
    $region11: #{tpu_custom_call.1} parent=1 // pred_check_branch
      %37 = sbr.rel (0) target = $region13
    $region12: #{tpu_custom_call.1} parent=1 // pred_region
      %s39 = ssub.s32 1536, 1536
      %40 = vsyncadd [#allocation7], %s39
      %s41 = sshll.u32 [#allocation8], 4
      %s42 = int_to_ptr.vmem [resolvable:$true] %s41
      %47 = dma.hbm_to_vmem [thread:$0]  %s2, 1536, %s42, [#allocation7], 384, 384, 24
    $region13: #{tpu_custom_call.1} parent=1 // pred_fallthru
      _
    // Predicated region
    $region14: #{tpu_custom_call.1} parent=1 // pred_check
      _
    $region15: #{tpu_custom_call.1} parent=1 // pred_check_branch
      %49 = sbr.rel (0) target = $region17
    $region16: #{tpu_custom_call.1} parent=1 // pred_region
      _
    $region17: #{tpu_custom_call.1} parent=1 // pred_fallthru
      _
    // Predicated region
    $region18: #{tpu_custom_call.1} parent=1 // pred_check
      _
    $region19: #{tpu_custom_call.1} parent=1 // pred_check_branch
      %51 = sbr.rel (0) target = $region21
    $region20: #{tpu_custom_call.1} parent=1 // pred_region
      _
    $region21: #{tpu_custom_call.1} parent=1 // pred_fallthru
      _
    // Predicated region
    $region22: #{tpu_custom_call.1} parent=1 // pred_check
      _
    $region23: #{tpu_custom_call.1} parent=1 // pred_check_branch
      %53 = sbr.rel (0) target = $region25
    $region24: #{tpu_custom_call.1} parent=1 // pred_region
      _
    $region25: #{tpu_custom_call.1} parent=1 // pred_fallthru
      _
    // Predicated region
    $region26: #{tpu_custom_call.1} parent=1 // pred_check
      _
    $region27: #{tpu_custom_call.1} parent=1 // pred_check_branch
      %55 = sbr.rel (0) target = $region29
    $region28: #{tpu_custom_call.1} parent=1 // pred_region
      %56 = dma.done [#allocation4], 128
    $region29: #{tpu_custom_call.1} parent=1 // pred_fallthru
      _
    // Predicated region
    $region30: #{tpu_custom_call.1} parent=1 // pred_check
      _
    $region31: #{tpu_custom_call.1} parent=1 // pred_check_branch
      %58 = sbr.rel (0) target = $region33
    $region32: #{tpu_custom_call.1} parent=1 // pred_region
      %59 = dma.done [#allocation7], 1536
    $region33: #{tpu_custom_call.1} parent=1 // pred_fallthru
      _
    // Predicated region
    $region34: #{tpu_custom_call.1} parent=1 // pred_check
      _
    $region35: #{tpu_custom_call.1} parent=1 // pred_check_branch
      %61 = sbr.rel (0) target = $region37
    $region36: #{tpu_custom_call.1} parent=1 // pred_region
      %62 = dma.done [#allocation7], 1536
    $region37: #{tpu_custom_call.1} parent=1 // pred_fallthru
      _
    %v63 = vld [vmem:[#allocation3] sm:$0xff]
    %v64 = vld [vmem:[#allocation6] sm:$0xff]
    %v65 = vld [vmem:[#allocation6 + $0x8] sm:$0xff]
    %v66 = vld [vmem:[#allocation6 + $0x10] sm:$0xff]
    %v67 = vld [vmem:[#allocation6 + $0x18] sm:$0xff]
    %v68 = vld [vmem:[#allocation6 + $0x20] sm:$0xff]
    %v69 = vld [vmem:[#allocation6 + $0x28] sm:$0xff]
    %v70 = vld [vmem:[#allocation6 + $0x30] sm:$0xff]
    %v71 = vld [vmem:[#allocation6 + $0x38] sm:$0xff]
    %v72 = vld [vmem:[#allocation6 + $0x40] sm:$0xff]
    %v73 = vld [vmem:[#allocation6 + $0x48] sm:$0xff]
    %v74 = vld [vmem:[#allocation6 + $0x50] sm:$0xff]
    %v75 = vld [vmem:[#allocation6 + $0x58] sm:$0xff]
    %v76 = vld [vmem:[%s3] sm:$0x7]
    %v78 = vlaneseq
    %v79 = vshrl.u32 %v78, 7
    %v80 = vsub.s32 0, %v79
    %v81 = vrot.slane %v76, %v80
    %v82 = vlaneseq
    %v83 = vshrl.u32 %v82, 7
    %v84 = vsub.s32 1, %v83
    %v85 = vrot.slane %v76, %v84
    %v86 = vlaneseq
    %v87 = vshrl.u32 %v86, 7
    %v88 = vsub.s32 2, %v87
    %v89 = vrot.slane %v76, %v88
    %vm93 = vcmask 261120
    %v95 = vsel %vm93, %v63, 0
    %97 = vmatprep.subr.mxu0 0.0
    %98 = vmatpush1.msra.mxu0 0.0
    %99 = vmatprep.subr.mxu0 0.0
    %100 = vmatpush1.msra.mxu0 0.0
    %101 = vmatprep.subr.mxu0 0.0
    %102 = vmatpush1.msra.mxu0 0.0
    %103 = vmatprep.subr.mxu0 0.0
    %104 = vmatpush1.msra.mxu0 0.0
    %105 = vmatprep.subr.mxu0 0.0
    %106 = vmatpush1.msra.mxu0 0.0
    %107 = vmatprep.subr.mxu0 0.0
    %108 = vmatpush1.msra.mxu0 0.0
    %109 = vmatprep.subr.mxu0 0.0
    %110 = vmatpush1.msra.mxu0 0.0
    %111 = vmatprep.subr.mxu0 0.0
    %112 = vmatpush1.msra.mxu0 0.0
    %113 = vmatprep.subr.mxu0 0.0
    %114 = vmatpush1.msra.mxu0 0.0
    %115 = vmatprep.subr.mxu0 0.0
    %116 = vmatpush1.msra.mxu0 0.0
    %117 = vmatprep.subr.mxu0 0.0
    %118 = vmatpush1.msra.mxu0 0.0
    %119 = vmatprep.subr.mxu0 0.0
    %120 = vmatpush1.msra.mxu0 0.0
    %121 = vmatprep.subr.mxu0 %v74
    %122 = vmatpush1.msra.mxu0 %v73
    %123 = vmatprep.subr.mxu0 %v71
    %124 = vmatpush1.msra.mxu0 %v70
    %125 = vmatprep.subr.mxu0 %v68
    %126 = vmatpush1.msra.mxu0 %v67
    %127 = vmatprep.subr.mxu0 %v65
    %128 = vmatpush1.msra.mxu0 %v64
    %129 = vmatprep.subr.mxu0 0.0
    %130 = vmatpush2.msra.mxu0 0.0
    %131 = vmatprep.subr.mxu0 0.0
    %132 = vmatpush2.msra.mxu0 0.0
    %133 = vmatprep.subr.mxu0 0.0
    %134 = vmatpush2.msra.mxu0 0.0
    %135 = vmatprep.subr.mxu0 0.0
    %136 = vmatpush2.msra.mxu0 0.0
    %137 = vmatprep.subr.mxu0 0.0
    %138 = vmatpush2.msra.mxu0 0.0
    %139 = vmatprep.subr.mxu0 0.0
    %140 = vmatpush2.msra.mxu0 0.0
    %141 = vmatprep.subr.mxu0 0.0
    %142 = vmatpush2.msra.mxu0 0.0
    %143 = vmatprep.subr.mxu0 0.0
    %144 = vmatpush2.msra.mxu0 0.0
    %145 = vmatprep.subr.mxu0 0.0
    %146 = vmatpush2.msra.mxu0 0.0
    %147 = vmatprep.subr.mxu0 0.0
    %148 = vmatpush2.msra.mxu0 0.0
    %149 = vmatprep.subr.mxu0 0.0
    %150 = vmatpush2.msra.mxu0 0.0
    %151 = vmatprep.subr.mxu0 0.0
    %152 = vmatpush2.msra.mxu0 0.0
    %153 = vmatprep.subr.mxu0 0.0
    %154 = vmatpush2.msra.mxu0 0.0
    %155 = vmatprep.subr.mxu0 0.0
    %156 = vmatpush2.msra.mxu0 0.0
    %157 = vmatprep.subr.mxu0 0.0
    %158 = vmatpush2.msra.mxu0 0.0
    %159 = vmatprep.subr.mxu0 0.0
    %160 = vmatpush2.msra.mxu0 0.0
    %161 = vmatprep.mubr.f32.mxu0 0.0
    %162 = vmatmul.mubr.f32.gmra.mxu0 %v95
    %v163 = vpop.f32.mrf.mxu0
    %v164 = vadd.f32 %v81, %v163
    %v165 = vpop.f32.mrf.mxu0
    %v166 = vadd.f32 %v85, %v165
    %167 = vdwg.mxu0
    %168 = vmatprep.subr.mxu0 0.0
    %169 = vmatpush1.msra.mxu0 0.0
    %170 = vmatprep.subr.mxu0 0.0
    %171 = vmatpush1.msra.mxu0 0.0
    %172 = vmatprep.subr.mxu0 0.0
    %173 = vmatpush1.msra.mxu0 0.0
    %174 = vmatprep.subr.mxu0 0.0
    %175 = vmatpush1.msra.mxu0 0.0
    %176 = vmatprep.subr.mxu0 0.0
    %177 = vmatpush1.msra.mxu0 0.0
    %178 = vmatprep.subr.mxu0 0.0
    %179 = vmatpush1.msra.mxu0 0.0
    %180 = vmatprep.subr.mxu0 0.0
    %181 = vmatpush1.msra.mxu0 0.0
    %182 = vmatprep.subr.mxu0 0.0
    %183 = vmatpush1.msra.mxu0 0.0
    %184 = vmatprep.subr.mxu0 0.0
    %185 = vmatpush1.msra.mxu0 0.0
    %186 = vmatprep.subr.mxu0 0.0
    %187 = vmatpush1.msra.mxu0 0.0
    %188 = vmatprep.subr.mxu0 0.0
    %189 = vmatpush1.msra.mxu0 0.0
    %190 = vmatprep.subr.mxu0 0.0
    %191 = vmatpush1.msra.mxu0 0.0
    %192 = vmatprep.subr.mxu0 0.0
    %193 = vmatpush1.msra.mxu0 %v75
    %194 = vmatprep.subr.mxu0 0.0
    %195 = vmatpush1.msra.mxu0 %v72
    %196 = vmatprep.subr.mxu0 0.0
    %197 = vmatpush1.msra.mxu0 %v69
    %198 = vmatprep.subr.mxu0 0.0
    %199 = vmatpush1.msra.mxu0 %v66
    %200 = vmatprep.subr.mxu0 0.0
    %201 = vmatpush2.msra.mxu0 0.0
    %202 = vmatprep.subr.mxu0 0.0
    %203 = vmatpush2.msra.mxu0 0.0
    %204 = vmatprep.subr.mxu0 0.0
    %205 = vmatpush2.msra.mxu0 0.0
    %206 = vmatprep.subr.mxu0 0.0
    %207 = vmatpush2.msra.mxu0 0.0
    %208 = vmatprep.subr.mxu0 0.0
    %209 = vmatpush2.msra.mxu0 0.0
    %210 = vmatprep.subr.mxu0 0.0
    %211 = vmatpush2.msra.mxu0 0.0
    %212 = vmatprep.subr.mxu0 0.0
    %213 = vmatpush2.msra.mxu0 0.0
    %214 = vmatprep.subr.mxu0 0.0
    %215 = vmatpush2.msra.mxu0 0.0
    %216 = vmatprep.subr.mxu0 0.0
    %217 = vmatpush2.msra.mxu0 0.0
    %218 = vmatprep.subr.mxu0 0.0
    %219 = vmatpush2.msra.mxu0 0.0
    %220 = vmatprep.subr.mxu0 0.0
    %221 = vmatpush2.msra.mxu0 0.0
    %222 = vmatprep.subr.mxu0 0.0
    %223 = vmatpush2.msra.mxu0 0.0
    %224 = vmatprep.subr.mxu0 0.0
    %225 = vmatpush2.msra.mxu0 0.0
    %226 = vmatprep.subr.mxu0 0.0
    %227 = vmatpush2.msra.mxu0 0.0
    %228 = vmatprep.subr.mxu0 0.0
    %229 = vmatpush2.msra.mxu0 0.0
    %230 = vmatprep.subr.mxu0 0.0
    %231 = vmatpush2.msra.mxu0 0.0
    %232 = vmatprep.mubr.f32.mxu0 0.0
    %233 = vmatmul.mubr.f32.gmra.mxu0 %v95
    %v234 = vpop.f32.mrf.mxu0
    %v235 = vadd.f32 %v89, %v234
    %v236 = vpop.f32.mrf.mxu0
    %237 = vdwg.mxu0
    %238 = vst [vmem:[#allocation2] sm:$0xff] %v164
    %239 = vst [vmem:[#allocation2 + $0x8] sm:$0xff] %v166
    %240 = vst [vmem:[#allocation2 + $0x10] sm:$0xff] %v235
    %v241 = vld [vmem:[#allocation8] sm:$0xff]
    %v242 = vld [vmem:[#allocation8 + $0x8] sm:$0xff]
    %v243 = vld [vmem:[#allocation8 + $0x10] sm:$0xff]
    %v244 = vld [vmem:[#allocation8 + $0x18] sm:$0xff]
    %v245 = vld [vmem:[#allocation8 + $0x20] sm:$0xff]
    %v246 = vld [vmem:[#allocation8 + $0x28] sm:$0xff]
    %v247 = vld [vmem:[#allocation8 + $0x30] sm:$0xff]
    %v248 = vld [vmem:[#allocation8 + $0x38] sm:$0xff]
    %v249 = vld [vmem:[#allocation8 + $0x40] sm:$0xff]
    %v250 = vld [vmem:[#allocation8 + $0x48] sm:$0xff]
    %v251 = vld [vmem:[#allocation8 + $0x50] sm:$0xff]
    %v252 = vld [vmem:[#allocation8 + $0x58] sm:$0xff]
    %v253 = vld [vmem:[%s4] sm:$0x7]
    %v254 = vld [vmem:[%s5] sm:$0x1]
    %v255 = vld [vmem:[#allocation2] ss:$8 sm:$0x7]
    %v257 = vlaneseq
    %v258 = vshrl.u32 %v257, 7
    %v259 = vsub.s32 0, %v258
    %v260 = vrot.slane %v253, %v259
    %v261 = vlaneseq
    %v262 = vshrl.u32 %v261, 7
    %v263 = vsub.s32 1, %v262
    %v264 = vrot.slane %v253, %v263
    %v265 = vlaneseq
    %v266 = vshrl.u32 %v265, 7
    %v267 = vsub.s32 2, %v266
    %v268 = vrot.slane %v253, %v267
    %v273 = vsel %vm93, %v254, 0
    %275 = vmatprep.subr.mxu0 0.0
    %276 = vmatpush1.msra.mxu0 0.0
    %277 = vmatprep.subr.mxu0 0.0
    %278 = vmatpush1.msra.mxu0 0.0
    %279 = vmatprep.subr.mxu0 0.0
    %280 = vmatpush1.msra.mxu0 0.0
    %281 = vmatprep.subr.mxu0 0.0
    %282 = vmatpush1.msra.mxu0 0.0
    %283 = vmatprep.subr.mxu0 0.0
    %284 = vmatpush1.msra.mxu0 0.0
    %285 = vmatprep.subr.mxu0 0.0
    %286 = vmatpush1.msra.mxu0 0.0
    %287 = vmatprep.subr.mxu0 0.0
    %288 = vmatpush1.msra.mxu0 0.0
    %289 = vmatprep.subr.mxu0 0.0
    %290 = vmatpush1.msra.mxu0 0.0
    %291 = vmatprep.subr.mxu0 0.0
    %292 = vmatpush1.msra.mxu0 0.0
    %293 = vmatprep.subr.mxu0 0.0
    %294 = vmatpush1.msra.mxu0 0.0
    %295 = vmatprep.subr.mxu0 0.0
    %296 = vmatpush1.msra.mxu0 0.0
    %297 = vmatprep.subr.mxu0 0.0
    %298 = vmatpush1.msra.mxu0 0.0
    %299 = vmatprep.subr.mxu0 %v251
    %300 = vmatpush1.msra.mxu0 %v250
    %301 = vmatprep.subr.mxu0 %v248
    %302 = vmatpush1.msra.mxu0 %v247
    %303 = vmatprep.subr.mxu0 %v245
    %304 = vmatpush1.msra.mxu0 %v244
    %305 = vmatprep.subr.mxu0 %v242
    %306 = vmatpush1.msra.mxu0 %v241
    %307 = vmatprep.subr.mxu0 0.0
    %308 = vmatpush2.msra.mxu0 0.0
    %309 = vmatprep.subr.mxu0 0.0
    %310 = vmatpush2.msra.mxu0 0.0
    %311 = vmatprep.subr.mxu0 0.0
    %312 = vmatpush2.msra.mxu0 0.0
    %313 = vmatprep.subr.mxu0 0.0
    %314 = vmatpush2.msra.mxu0 0.0
    %315 = vmatprep.subr.mxu0 0.0
    %316 = vmatpush2.msra.mxu0 0.0
    %317 = vmatprep.subr.mxu0 0.0
    %318 = vmatpush2.msra.mxu0 0.0
    %319 = vmatprep.subr.mxu0 0.0
    %320 = vmatpush2.msra.mxu0 0.0
    %321 = vmatprep.subr.mxu0 0.0
    %322 = vmatpush2.msra.mxu0 0.0
    %323 = vmatprep.subr.mxu0 0.0
    %324 = vmatpush2.msra.mxu0 0.0
    %325 = vmatprep.subr.mxu0 0.0
    %326 = vmatpush2.msra.mxu0 0.0
    %327 = vmatprep.subr.mxu0 0.0
    %328 = vmatpush2.msra.mxu0 0.0
    %329 = vmatprep.subr.mxu0 0.0
    %330 = vmatpush2.msra.mxu0 0.0
    %331 = vmatprep.subr.mxu0 0.0
    %332 = vmatpush2.msra.mxu0 0.0
    %333 = vmatprep.subr.mxu0 0.0
    %334 = vmatpush2.msra.mxu0 0.0
    %335 = vmatprep.subr.mxu0 0.0
    %336 = vmatpush2.msra.mxu0 0.0
    %337 = vmatprep.subr.mxu0 0.0
    %338 = vmatpush2.msra.mxu0 0.0
    %339 = vmatprep.mubr.f32.mxu0 0.0
    %340 = vmatmul.mubr.f32.gmra.mxu0 %v273
    %v341 = vpop.f32.mrf.mxu0
    %v342 = vadd.f32 %v260, %v341
    %v343 = vpop.f32.mrf.mxu0
    %v344 = vadd.f32 %v264, %v343
    %345 = vdwg.mxu0
    %346 = vmatprep.subr.mxu0 0.0
    %347 = vmatpush1.msra.mxu0 0.0
    %348 = vmatprep.subr.mxu0 0.0
    %349 = vmatpush1.msra.mxu0 0.0
    %350 = vmatprep.subr.mxu0 0.0
    %351 = vmatpush1.msra.mxu0 0.0
    %352 = vmatprep.subr.mxu0 0.0
    %353 = vmatpush1.msra.mxu0 0.0
    %354 = vmatprep.subr.mxu0 0.0
    %355 = vmatpush1.msra.mxu0 0.0
    %356 = vmatprep.subr.mxu0 0.0
    %357 = vmatpush1.msra.mxu0 0.0
    %358 = vmatprep.subr.mxu0 0.0
    %359 = vmatpush1.msra.mxu0 0.0
    %360 = vmatprep.subr.mxu0 0.0
    %361 = vmatpush1.msra.mxu0 0.0
    %362 = vmatprep.subr.mxu0 0.0
    %363 = vmatpush1.msra.mxu0 0.0
    %364 = vmatprep.subr.mxu0 0.0
    %365 = vmatpush1.msra.mxu0 0.0
    %366 = vmatprep.subr.mxu0 0.0
    %367 = vmatpush1.msra.mxu0 0.0
    %368 = vmatprep.subr.mxu0 0.0
    %369 = vmatpush1.msra.mxu0 0.0
    %370 = vmatprep.subr.mxu0 0.0
    %371 = vmatpush1.msra.mxu0 %v252
    %372 = vmatprep.subr.mxu0 0.0
    %373 = vmatpush1.msra.mxu0 %v249
    %374 = vmatprep.subr.mxu0 0.0
    %375 = vmatpush1.msra.mxu0 %v246
    %376 = vmatprep.subr.mxu0 0.0
    %377 = vmatpush1.msra.mxu0 %v243
    %378 = vmatprep.subr.mxu0 0.0
    %379 = vmatpush2.msra.mxu0 0.0
    %380 = vmatprep.subr.mxu0 0.0
    %381 = vmatpush2.msra.mxu0 0.0
    %382 = vmatprep.subr.mxu0 0.0
    %383 = vmatpush2.msra.mxu0 0.0
    %384 = vmatprep.subr.mxu0 0.0
    %385 = vmatpush2.msra.mxu0 0.0
    %386 = vmatprep.subr.mxu0 0.0
    %387 = vmatpush2.msra.mxu0 0.0
    %388 = vmatprep.subr.mxu0 0.0
    %389 = vmatpush2.msra.mxu0 0.0
    %390 = vmatprep.subr.mxu0 0.0
    %391 = vmatpush2.msra.mxu0 0.0
    %392 = vmatprep.subr.mxu0 0.0
    %393 = vmatpush2.msra.mxu0 0.0
    %394 = vmatprep.subr.mxu0 0.0
    %395 = vmatpush2.msra.mxu0 0.0
    %396 = vmatprep.subr.mxu0 0.0
    %397 = vmatpush2.msra.mxu0 0.0
    %398 = vmatprep.subr.mxu0 0.0
    %399 = vmatpush2.msra.mxu0 0.0
    %400 = vmatprep.subr.mxu0 0.0
    %401 = vmatpush2.msra.mxu0 0.0
    %402 = vmatprep.subr.mxu0 0.0
    %403 = vmatpush2.msra.mxu0 0.0
    %404 = vmatprep.subr.mxu0 0.0
    %405 = vmatpush2.msra.mxu0 0.0
    %406 = vmatprep.subr.mxu0 0.0
    %407 = vmatpush2.msra.mxu0 0.0
    %408 = vmatprep.subr.mxu0 0.0
    %409 = vmatpush2.msra.mxu0 0.0
    %410 = vmatprep.mubr.f32.mxu0 0.0
    %411 = vmatmul.mubr.f32.gmra.mxu0 %v273
    %v412 = vpop.f32.mrf.mxu0
    %v413 = vadd.f32 %v268, %v412
    %v414 = vpop.f32.mrf.mxu0
    %415 = vdwg.mxu0
    %v416 = vadd.f32 %v255, %v342
    %v417 = vxor.u32 %v416, 2147483648
    %v418 = vmul.f32 %v417, 1.442695
    %v419 = vpow.pop %v418
    %v420 = vadd.f32 %v419, 1.0
    %v421 = vrcp.pop %v420
    %v422 = vmul.f32 1.0, %v421
    %v424 = vrot.slane %v255, 1
    %v426 = vadd.f32 %v424, %v344
    %v427 = vxor.u32 %v426, 2147483648
    %v428 = vmul.f32 %v427, 1.442695
    %v429 = vpow.pop %v428
    %v430 = vadd.f32 %v429, 1.0
    %v431 = vrcp.pop %v430
    %v432 = vmul.f32 1.0, %v431
    %v433 = vmul.f32 %v422, %v413
    %v434 = vrot.slane %v255, 2
    %v436 = vadd.f32 %v434, %v433
    %v437 = vtanh.pop %v436
    %v438 = vsub.f32 1.0, %v432
    %v439 = vmul.f32 %v438, %v437
    %v440 = vmul.f32 %v432, %v254
    %v441 = vadd.f32 %v439, %v440
    %442 = vst [vmem:[#allocation9] sm:$0x1] %v441
    // Predicated region
    $region38: #{tpu_custom_call.1} parent=1 // pred_check
      _
    $region39: #{tpu_custom_call.1} parent=1 // pred_check_branch
      %444 = sbr.rel (0) target = $region41
    $region40: #{tpu_custom_call.1} parent=1 // pred_region
      %s446 = ssub.s32 128, 128
      %447 = vsyncadd [#allocation5], %s446
      %s449 = sshll.u32 [#allocation9], 4
      %s450 = int_to_ptr.vmem [resolvable:$true] %s449
      %452 = dma.vmem_to_hbm [thread:$0]  %s450, 128, %s6, [#allocation5]
    $region41: #{tpu_custom_call.1} parent=1 // pred_fallthru
      _
    // Predicated region
    $region42: #{tpu_custom_call.1} parent=1 // pred_check
      _
    $region43: #{tpu_custom_call.1} parent=1 // pred_check_branch
      %454 = sbr.rel (0) target = $region45
    $region44: #{tpu_custom_call.1} parent=1 // pred_region
      %455 = dma.done [#allocation5], 128
    $region45: #{tpu_custom_call.1} parent=1 // pred_fallthru
      _
    %456 = vsyncpa [#allocation4], 1
    %457 = vsyncpa [#allocation7], 1
    %458 = vsyncpa [#allocation5], 1

</llo_original>
